<compile_context>
chip_gen: v6e
topology: v6e:2x2x1
jax: 0.10.0
libtpu: 0.0.40
codegen_flags: <defaults>
</compile_context>

<pallas_src>
import jax
import jax.numpy as jnp
from jax import lax
from jax.experimental import pallas as pl
from jax.experimental.pallas import tpu as pltpu


# ------------------------- GroupNorm(32) + swish --------------------------- #

def _make_gn_swish_kernel(eps):
    def kernel(x_ref, gmat_ref, gamma_ref, beta_ref, o_ref):
        x = x_ref[...].astype(jnp.float32)                  # (HW, C)
        s1 = jnp.sum(x, axis=0, keepdims=True)              # per-channel sum
        s2 = jnp.sum(x * x, axis=0, keepdims=True)          # per-channel sumsq
        # gmat averages the per-channel sums within each group -> per-channel
        # group statistics, without any in-kernel lane reshuffling.
        mean = jnp.dot(s1, gmat_ref[...], preferred_element_type=jnp.float32)
        ex2 = jnp.dot(s2, gmat_ref[...], preferred_element_type=jnp.float32)
        inv = lax.rsqrt(ex2 - mean * mean + eps)
        scale = gamma_ref[...] * inv
        shift = beta_ref[...] - mean * scale
        h = x * scale + shift
        o_ref[...] = (h * (1.0 / (1.0 + jnp.exp(-h)))).astype(o_ref.dtype)
    return kernel


def _gn_swish(x_flat, gamma, beta, *, num_groups=32, eps=1e-6):
    # TODO(synk): for very large feature maps, tile HW with a two-pass
    # (stats, then normalize) scheme instead of one full (HW, C) block.
    B, HW, C = x_flat.shape
    assert C % num_groups == 0
    cg = C // num_groups
    gid = jnp.arange(C, dtype=jnp.int32) // cg
    gmat = (gid[:, None] == gid[None, :]).astype(jnp.float32) / float(HW * cg)
    return pl.pallas_call(
        _make_gn_swish_kernel(eps),
        out_shape=jax.ShapeDtypeStruct((B, HW, C), jnp.bfloat16),
        grid=(B,),
        in_specs=[
            pl.BlockSpec((pl.Squeezed(), HW, C), lambda b: (b, 0, 0)),
            pl.BlockSpec((C, C), lambda b: (0, 0)),
            pl.BlockSpec((1, C), lambda b: (0, 0)),
            pl.BlockSpec((1, C), lambda b: (0, 0)),
        ],
        out_specs=pl.BlockSpec((pl.Squeezed(), HW, C), lambda b: (b, 0, 0)),
        compiler_params=pltpu.CompilerParams(dimension_semantics=("parallel",)),
    )(x_flat, gmat, gamma.reshape(1, C).astype(jnp.float32),
      beta.reshape(1, C).astype(jnp.float32))


# -------------------------- temb projection (silu + Linear) ---------------- #

def _temb_proj_kernel(t_ref, w_ref, b_ref, o_ref):
    t = t_ref[...].astype(jnp.float32)
    s = t * (1.0 / (1.0 + jnp.exp(-t)))                     # silu(temb)
    o_ref[...] = jnp.dot(s, w_ref[...],
                         preferred_element_type=jnp.float32) + b_ref[...]


def _temb_proj(temb, w_in_out, b):
    B, Tc = temb.shape
    cout = w_in_out.shape[1]
    return pl.pallas_call(
        _temb_proj_kernel,
        out_shape=jax.ShapeDtypeStruct((B, cout), jnp.float32),
        grid=(1,),
        in_specs=[pl.BlockSpec((B, Tc), lambda i: (0, 0)),
                  pl.BlockSpec((Tc, cout), lambda i: (0, 0)),
                  pl.BlockSpec((1, cout), lambda i: (0, 0))],
        out_specs=pl.BlockSpec((B, cout), lambda i: (0, 0)),
    )(temb.astype(jnp.float32), w_in_out.astype(jnp.float32),
      b.astype(jnp.float32).reshape(1, cout))


# ----------------- 3x3 conv (pad=1) with fused epilogue --------------------- #

def _make_conv3x3_kernel(th, w, cin, cout, res_mode):
    hw_t = th * w

    def kernel(*refs):
        if res_mode == "none":
            xp_hbm, wk_ref, badd_ref, o_ref, xbuf, sem = refs
            res_ref = wn_ref = bn_ref = None
        elif res_mode == "identity":
            xp_hbm, wk_ref, badd_ref, res_ref, o_ref, xbuf, sem = refs
            wn_ref = bn_ref = None
        else:  # "project" (fused 1x1 nin_shortcut)
            xp_hbm, wk_ref, badd_ref, res_ref, wn_ref, bn_ref, o_ref, xbuf, sem = refs

        b = pl.program_id(0)
        i = pl.program_id(1)
        n_t = pl.num_programs(1)

        def start_fetch(tile, slot):
            pltpu.make_async_copy(
                xp_hbm.at[b, pl.ds(tile * th, th + 2)],
                xbuf.at[slot], sem.at[slot]).start()

        @pl.when(i == 0)
        def _():
            start_fetch(0, 0)            # prime the first haloed row tile

        slot = i % 2
        pltpu.make_async_copy(            # wait for the tile feeding this step
            xp_hbm.at[b, pl.ds(0, th + 2)], xbuf.at[slot], sem.at[slot]).wait()

        @pl.when(i + 1 < n_t)
        def _():
            start_fetch(i + 1, 1 - slot)  # prefetch next tile behind the compute

        xt = xbuf.at[slot]                # (th+2, W+2, cin) bf16, VMEM resident
        taps = [xt[ry:ry + th, rx:rx + w, :].reshape(hw_t, cin)
                for ry in range(3) for rx in range(3)]

        if cin % 128 == 0:
            # fused K = 9*cin: one MXU matmul per (batch, row tile)
            xk = jnp.concatenate(taps, axis=-1)
            acc = jnp.dot(xk, wk_ref[...], preferred_element_type=jnp.float32)
        else:
            # lane-unaligned channel counts: accumulate tap matmuls in registers
            acc = jnp.zeros((hw_t, cout), jnp.float32)
            for t, tap in enumerate(taps):
                acc = acc + jnp.dot(tap, wk_ref[t * cin:(t + 1) * cin, :],
                                    preferred_element_type=jnp.float32)

        acc = acc + badd_ref[...]         # conv bias (+ temb projection for conv1)
        if res_mode == "identity":
            acc = acc + res_ref[...].astype(jnp.float32)
        elif res_mode == "project":
            acc = acc + jnp.dot(res_ref[...], wn_ref[...],
                                preferred_element_type=jnp.float32) + bn_ref[...]
        o_ref[...] = acc.astype(o_ref.dtype)

    return kernel


def _pick_tile_h(H, W, Wp, cin):
    budget_rows = max(8, (2 * 1024 * 1024) // max(1, Wp * cin * 2))
    for th in range(min(H, budget_rows), 0, -1):
        if H % th == 0 and ((th * W) % 8 == 0 or th == H):
            return th
    return H


def _conv3x3(xpad, wk, badd, *, res=None, res_mode="none", wn=None, bn=None,
             out_dtype=jnp.bfloat16, tile_h=None):
    """xpad: (B, H+2, W+2, Cin) bf16 (zero-padded NHWC); wk: (9*Cin, Cout) bf16."""
    B, Hp, Wp, cin = xpad.shape
    H, W = Hp - 2, Wp - 2
    cout = wk.shape[1]
    th = tile_h if tile_h is not None else _pick_tile_h(H, W, Wp, cin)
    assert H % th == 0 and ((th * W) % 8 == 0 or th == H)
    n_t = H // th
    hw_t = th * W

    in_specs = [
        pl.BlockSpec(memory_space=pl.ANY),                        # padded image (HBM)
        pl.BlockSpec((9 * cin, cout), lambda b, i: (0, 0)),       # resident weights
        pl.BlockSpec((pl.Squeezed(), 1, cout), lambda b, i: (b, 0, 0)),
    ]
    args = [xpad, wk, badd]
    if res_mode != "none":
        cres = res.shape[-1]
        in_specs.append(pl.BlockSpec((pl.Squeezed(), hw_t, cres),
                                     lambda b, i: (b, i, 0)))
        args.append(res)
    if res_mode == "project":
        in_specs.append(pl.BlockSpec((wn.shape[0], wn.shape[1]),
                                     lambda b, i: (0, 0)))
        in_specs.append(pl.BlockSpec((1, cout), lambda b, i: (0, 0)))
        args += [wn, bn]

    return pl.pallas_call(
        _make_conv3x3_kernel(th, W, cin, cout, res_mode),
        out_shape=jax.ShapeDtypeStruct((B, H * W, cout), out_dtype),
        grid=(B, n_t),
        in_specs=in_specs,
        out_specs=pl.BlockSpec((pl.Squeezed(), hw_t, cout), lambda b, i: (b, i, 0)),
        scratch_shapes=[pltpu.VMEM((2, th + 2, Wp, cin), xpad.dtype),
                        pltpu.SemaphoreType.DMA((2,))],
        compiler_params=pltpu.CompilerParams(
            dimension_semantics=("parallel", "arbitrary"),
            vmem_limit_bytes=32 * 1024 * 1024),
    )(*args)


# ------------------------------ ResnetBlock -------------------------------- #

def resnet_block_pallas(x_nchw, temb, params, *, num_groups=32, eps=1e-6,
                        use_conv_shortcut=False, tile_h=None):
    B, cin, H, W = x_nchw.shape
    cout = params["conv1_w"].shape[0]
    HW = H * W

    x_flat = jnp.transpose(x_nchw, (0, 2, 3, 1)).reshape(B, HW, cin)
    x_flat = x_flat.astype(jnp.bfloat16)

    def pad_img(flat, c):
        return jnp.pad(flat.reshape(B, H, W, c), ((0, 0), (1, 1), (1, 1), (0, 0)))

    def conv_w(w):   # (Cout, Cin, 3, 3) -> (9*Cin, Cout), matches in-kernel tap order
        return jnp.transpose(w, (2, 3, 1, 0)).reshape(-1, w.shape[0]).astype(jnp.bfloat16)

    # h = conv1(swish(GN1(x))) + bias1 + temb_proj(silu(temb)) -----------------
    h = _gn_swish(x_flat, params["gn1_g"], params["gn1_b"],
                  num_groups=num_groups, eps=eps)
    badd1 = params["conv1_b"].astype(jnp.float32)[None, :]
    if temb is not None:
        badd1 = badd1 + _temb_proj(temb, params["temb_w"].T, params["temb_b"])
    badd1 = jnp.broadcast_to(badd1, (B, cout)).reshape(B, 1, cout)
    h = _conv3x3(pad_img(h, cin), conv_w(params["conv1_w"]), badd1,
                 out_dtype=jnp.bfloat16, tile_h=tile_h)

    # out = conv2(swish(GN2(h))) + bias2 + shortcut(x) -------------------------
    h = _gn_swish(h, params["gn2_g"], params["gn2_b"],
                  num_groups=num_groups, eps=eps)
    badd2 = jnp.broadcast_to(params["conv2_b"].astype(jnp.float32)[None, None, :],
                             (B, 1, cout))

    if cin == cout:
        res, res_mode, wn, bn = x_flat, "identity", None, None
    elif use_conv_shortcut:
        badd_s = jnp.broadcast_to(
            params["convs_b"].astype(jnp.float32)[None, None, :], (B, 1, cout))
        res = _conv3x3(pad_img(x_flat, cin), conv_w(params["convs_w"]), badd_s,
                       out_dtype=jnp.bfloat16, tile_h=tile_h)
        res_mode, wn, bn = "identity", None, None
    else:
        res, res_mode = x_flat, "project"
        wn = params["nin_w"][:, :, 0, 0].T.astype(jnp.bfloat16)     # (cin, cout)
        bn = params["nin_b"].astype(jnp.float32).reshape(1, cout)

    out = _conv3x3(pad_img(h, cout), conv_w(params["conv2_w"]), badd2,
                   res=res, res_mode=res_mode, wn=wn, bn=bn,
                   out_dtype=jnp.float32, tile_h=tile_h)

    return jnp.transpose(out.reshape(B, H, W, cout), (0, 3, 1, 2))


# --------------------------- pure-JAX reference ----------------------------- #

def resnet_block_ref(x, temb, p, *, num_groups=32, eps=1e-6, use_conv_shortcut=False):
    def gn_swish(h, gamma, beta):
        B, C, H, W = h.shape
        g = h.reshape(B, num_groups, (C // num_groups) * H * W)
        mean = jnp.mean(g, axis=-1, keepdims=True)
        var = jnp.mean((g - mean) ** 2, axis=-1, keepdims=True)
        g = (g - mean) / jnp.sqrt(var + eps)
        h = g.reshape(B, C, H, W) * gamma[None, :, None, None] + beta[None, :, None, None]
        return h * jax.nn.sigmoid(h)

    def conv(h, w, b, pad):
        y = lax.conv_general_dilated(h, w, (1, 1), ((pad, pad), (pad, pad)),
                                     dimension_numbers=("NCHW", "OIHW", "NCHW"))
        return y + b[None, :, None, None]

    cin, cout = x.shape[1], p["conv1_w"].shape[0]
    h = gn_swish(x, p["gn1_g"], p["gn1_b"])
    h = conv(h, p["conv1_w"], p["conv1_b"], 1)
    if temb is not None:
        t = temb * jax.nn.sigmoid(temb)
        h = h + (t @ p["temb_w"].T + p["temb_b"])[:, :, None, None]
    h = gn_swish(h, p["gn2_g"], p["gn2_b"])
    h = conv(h, p["conv2_w"], p["conv2_b"], 1)
    if cin != cout:
        if use_conv_shortcut:
            x = conv(x, p["convs_w"], p["convs_b"], 1)
        else:
            x = conv(x, p["nin_w"], p["nin_b"], 0)
    return x + h


# ----------------------------------- main ----------------------------------- #

if __name__ == "__main__":
    key = jax.random.PRNGKey(0)
    ks = jax.random.split(key, 14)
    B, CIN, COUT, H, W, TC = 2, 128, 256, 16, 16, 512

    x = jax.random.normal(ks[0], (B, CIN, H, W), jnp.float32)
    temb = jax.random.normal(ks[1], (B, TC), jnp.float32)

    p = {
        "gn1_g": 1.0 + 0.1 * jax.random.normal(ks[2], (CIN,), jnp.float32),
        "gn1_b": 0.1 * jax.random.normal(ks[3], (CIN,), jnp.float32),
        "conv1_w": 0.04 * jax.random.normal(ks[4], (COUT, CIN, 3, 3), jnp.float32),
        "conv1_b": 0.1 * jax.random.normal(ks[5], (COUT,), jnp.float32),
        "temb_w": 0.04 * jax.random.normal(ks[6], (COUT, TC), jnp.float32),
        "temb_b": 0.1 * jax.random.normal(ks[7], (COUT,), jnp.float32),
        "gn2_g": 1.0 + 0.1 * jax.random.normal(ks[8], (COUT,), jnp.float32),
        "gn2_b": 0.1 * jax.random.normal(ks[9], (COUT,), jnp.float32),
        "conv2_w": 0.03 * jax.random.normal(ks[10], (COUT, COUT, 3, 3), jnp.float32),
        "conv2_b": 0.1 * jax.random.normal(ks[11], (COUT,), jnp.float32),
        "nin_w": 0.08 * jax.random.normal(ks[12], (COUT, CIN, 1, 1), jnp.float32),
        "nin_b": 0.1 * jax.random.normal(ks[13], (COUT,), jnp.float32),
    }

    # tile_h=8 -> 2 row tiles per image, exercising the haloed-DMA tiling path.
    y = resnet_block_pallas(x, temb, p, tile_h=8)
    y = jax.block_until_ready(y)

    y_ref = resnet_block_ref(x, temb, p)
    assert y.shape == (B, COUT, H, W), y.shape
    err = float(jnp.max(jnp.abs(y - y_ref)))
    scale = float(jnp.max(jnp.abs(y_ref)))
    assert err <= 0.05 * scale + 1e-2, (err, scale)

    print("KERNEL_OK")
</pallas_src>

<mosaic_0001>
module attributes {stable_mosaic.version = 11 : i64} {
  func.func @kernel(%arg0: i32, %arg1: memref<1x256x128xbf16, #tpu.memory_space<vmem>>, %arg2: memref<128x128xf32, #tpu.memory_space<vmem>>, %arg3: memref<1x128xf32, #tpu.memory_space<vmem>>, %arg4: memref<1x128xf32, #tpu.memory_space<vmem>>, %arg5: memref<1x256x128xbf16, #tpu.memory_space<vmem>>) attributes {dimension_semantics = [#tpu.dimension_semantics<parallel>], iteration_bounds = array<i64: 2>, scalar_prefetch = 0 : i64, scratch_operands = 0 : i64, tpu.core_type = #tpu.core_type<tc>, window_params = [{transform_indices = @transform_0, window_bounds = array<i64: 1, 256, 128>}, {pipeline_mode = #tpu.pipeline_mode<synchronous>, transform_indices = @transform_1, window_bounds = array<i64: 128, 128>}, {pipeline_mode = #tpu.pipeline_mode<synchronous>, transform_indices = @transform_2, window_bounds = array<i64: 1, 128>}, {pipeline_mode = #tpu.pipeline_mode<synchronous>, transform_indices = @transform_3, window_bounds = array<i64: 1, 128>}, {transform_indices = @transform_4, window_bounds = array<i64: 1, 256, 128>}]} {
    %c0 = arith.constant 0 : index
    %c0_0 = arith.constant 0 : index
    %c0_1 = arith.constant 0 : index
    %0 = vector.load %arg1[%c0, %c0_0, %c0_1] : memref<1x256x128xbf16, #tpu.memory_space<vmem>>, vector<1x256x128xbf16>
    %1 = vector.shape_cast %0 : vector<1x256x128xbf16> to vector<256x128xbf16>
    %2 = arith.extf %1 : vector<256x128xbf16> to vector<256x128xf32>
    %cst = arith.constant dense<0.000000e+00> : vector<128xf32>
    %3 = vector.multi_reduction <add>, %2, %cst [0] : vector<256x128xf32> to vector<128xf32>
    %4 = vector.shape_cast %3 : vector<128xf32> to vector<1x128xf32>
    %5 = arith.mulf %2, %2 : vector<256x128xf32>
    %cst_2 = arith.constant dense<0.000000e+00> : vector<128xf32>
    %6 = vector.multi_reduction <add>, %5, %cst_2 [0] : vector<256x128xf32> to vector<128xf32>
    %7 = vector.shape_cast %6 : vector<128xf32> to vector<1x128xf32>
    %c0_3 = arith.constant 0 : index
    %c0_4 = arith.constant 0 : index
    %8 = vector.load %arg2[%c0_3, %c0_4] : memref<128x128xf32, #tpu.memory_space<vmem>>, vector<128x128xf32>
    %cst_5 = arith.constant dense<0.000000e+00> : vector<1x128xf32>
    %9 = tpu.matmul %4, %8, %cst_5 {dimension_numbers = #tpu.dot_dimension_numbers<[1], [0], [0], [1], [0, 0, 1, 1], [], []>} : vector<1x128xf32>, vector<128x128xf32>, vector<1x128xf32> -> vector<1x128xf32>
    %c0_6 = arith.constant 0 : index
    %c0_7 = arith.constant 0 : index
    %10 = vector.load %arg2[%c0_6, %c0_7] : memref<128x128xf32, #tpu.memory_space<vmem>>, vector<128x128xf32>
    %cst_8 = arith.constant dense<0.000000e+00> : vector<1x128xf32>
    %11 = tpu.matmul %7, %10, %cst_8 {dimension_numbers = #tpu.dot_dimension_numbers<[1], [0], [0], [1], [0, 0, 1, 1], [], []>} : vector<1x128xf32>, vector<128x128xf32>, vector<1x128xf32> -> vector<1x128xf32>
    %12 = arith.mulf %9, %9 : vector<1x128xf32>
    %13 = arith.subf %11, %12 : vector<1x128xf32>
    %cst_9 = arith.constant 9.99999997E-7 : f32
    %14 = vector.broadcast %cst_9 : f32 to vector<1x128xf32>
    %15 = arith.addf %13, %14 : vector<1x128xf32>
    %16 = math.rsqrt %15 : vector<1x128xf32>
    %c0_10 = arith.constant 0 : index
    %c0_11 = arith.constant 0 : index
    %17 = vector.load %arg3[%c0_10, %c0_11] : memref<1x128xf32, #tpu.memory_space<vmem>>, vector<1x128xf32>
    %18 = arith.mulf %17, %16 : vector<1x128xf32>
    %c0_12 = arith.constant 0 : index
    %c0_13 = arith.constant 0 : index
    %19 = vector.load %arg4[%c0_12, %c0_13] : memref<1x128xf32, #tpu.memory_space<vmem>>, vector<1x128xf32>
    %20 = arith.mulf %9, %18 : vector<1x128xf32>
    %21 = arith.subf %19, %20 : vector<1x128xf32>
    %22 = vector.broadcast %18 : vector<1x128xf32> to vector<256x128xf32>
    %23 = arith.mulf %2, %22 : vector<256x128xf32>
    %24 = vector.broadcast %21 : vector<1x128xf32> to vector<256x128xf32>
    %25 = arith.addf %23, %24 : vector<256x128xf32>
    %cst_14 = arith.constant 0.000000e+00 : f32
    %26 = vector.broadcast %cst_14 : f32 to vector<256x128xf32>
    %27 = arith.subf %26, %25 : vector<256x128xf32>
    %28 = math.exp %27 : vector<256x128xf32>
    %cst_15 = arith.constant 1.000000e+00 : f32
    %29 = vector.broadcast %cst_15 : f32 to vector<256x128xf32>
    %30 = arith.addf %29, %28 : vector<256x128xf32>
    %cst_16 = arith.constant 1.000000e+00 : f32
    %31 = vector.broadcast %cst_16 : f32 to vector<256x128xf32>
    %32 = arith.divf %31, %30 : vector<256x128xf32>
    %33 = arith.mulf %25, %32 : vector<256x128xf32>
    %34 = arith.truncf %33 : vector<256x128xf32> to vector<256x128xbf16>
    %c0_17 = arith.constant 0 : index
    %c0_18 = arith.constant 0 : index
    %c0_19 = arith.constant 0 : index
    %35 = vector.load %arg5[%c0_17, %c0_18, %c0_19] : memref<1x256x128xbf16, #tpu.memory_space<vmem>>, vector<1x256x128xbf16>
    %36 = vector.shape_cast %35 : vector<1x256x128xbf16> to vector<256x128xbf16>
    %37 = vector.shape_cast %34 : vector<256x128xbf16> to vector<1x256x128xbf16>
    tpu.vector_store %arg5[%c0_17, %c0_18, %c0_19], %37 {strides = array<i32>} : memref<1x256x128xbf16, #tpu.memory_space<vmem>>, vector<1x256x128xbf16>,
    return
  }
  func.func @transform_0(%arg0: i32) -> (i32, i32, i32) {
    %c0_i32 = arith.constant 0 : i32
    %c0_i32_0 = arith.constant 0 : i32
    %c0_i32_1 = arith.constant 0 : i32
    return %arg0, %c0_i32, %c0_i32_0 : i32, i32, i32
  }
  func.func @transform_1(%arg0: i32) -> (i32, i32) {
    %c0_i32 = arith.constant 0 : i32
    %c0_i32_0 = arith.constant 0 : i32
    %c0_i32_1 = arith.constant 0 : i32
    return %c0_i32, %c0_i32_0 : i32, i32
  }
  func.func @transform_2(%arg0: i32) -> (i32, i32) {
    %c0_i32 = arith.constant 0 : i32
    %c0_i32_0 = arith.constant 0 : i32
    %c0_i32_1 = arith.constant 0 : i32
    return %c0_i32, %c0_i32_0 : i32, i32
  }
  func.func @transform_3(%arg0: i32) -> (i32, i32) {
    %c0_i32 = arith.constant 0 : i32
    %c0_i32_0 = arith.constant 0 : i32
    %c0_i32_1 = arith.constant 0 : i32
    return %c0_i32, %c0_i32_0 : i32, i32
  }
  func.func @transform_4(%arg0: i32) -> (i32, i32, i32) {
    %c0_i32 = arith.constant 0 : i32
    %c0_i32_0 = arith.constant 0 : i32
    %c0_i32_1 = arith.constant 0 : i32
    return %arg0, %c0_i32, %c0_i32_0 : i32, i32, i32
  }
}

</mosaic_0001>

<llo_original>
// kernel: tpu_custom_call.1
$region0: #{tpu_custom_call.1}
  #allocation0 [shape = 'u32[]', space=smem, size = 0x4, offset = 0x4, fixed_abs, tag = 'smem constant byte address 0x4 - core index']
  #allocation1 [shape = 'u32[144,128]{1,0:T(1,128)}', space=vmem, size = 0x12000, scoped, tag = 'internal scratch']
  %s0 = inlined_call_operand.hbm [shape: bf16[2,256,128], index: 0, kind: input, shape index: {}]
  %s1 = inlined_call_operand.hbm [shape: f32[128,128], index: 1, kind: input, shape index: {}]
  %s2 = inlined_call_operand.vmem [shape: f32[1,128], index: 2, kind: input, shape index: {}]
  %s3 = inlined_call_operand.vmem [shape: f32[1,128], index: 3, kind: input, shape index: {}]
  %s4 = inlined_call_operand.hbm [shape: bf16[2,256,128], index: 4, kind: output, shape index: {}]
  %s5 = sld [smem:[#allocation0]]
  $region57: #{tpu_custom_call.1} parent=0
    _
  %s7 = ssub.s32 1, %s5
  %s8 = scalar_select 0, %s7, %s5
  $region1: #{tpu_custom_call.1} parent=0
    #allocation2 [shape = 'u8[131072]{0}', space=vmem, size = 0x20000, scoped, tag = 'input window, operand 0']
    #allocation3 [shape = 's32[2]{0}', space=sflag, size = 0x8, scoped, tag = 'scoped memory for tpu_custom_call.1']
    #allocation4 [shape = 's32[2]{0}', space=sflag, size = 0x8, scoped, tag = 'scoped memory for tpu_custom_call.1']
    #allocation5 [shape = 'u8[65536]{0}', space=vmem, size = 0x10000, scoped, tag = 'input window, operand 1, single buffered']
    #allocation6 [shape = 's32[1]{0}', space=sflag, size = 0x4, scoped, tag = 'scoped memory for tpu_custom_call.1']
    #allocation7 [shape = 'u8[131072]{0}', space=vmem, size = 0x20000, scoped, tag = 'output window, operand 0']
    %9 = vsyncpa [#allocation3], 0
    %s10 = scalar_lea.sflag [#allocation3], 1
    %11 = vsyncpa %s10, 0
    %12 = vsyncpa [#allocation6], 0
    %13 = vsyncpa [#allocation4], 0
    %s14 = scalar_lea.sflag [#allocation4], 1
    %15 = vsyncpa %s14, 0
    loop: start=0, step=1, limit=4
    $region2: #{tpu_custom_call.1} parent=1 // loop_pre_header
      _
    $region3: #{tpu_custom_call.1} parent=1 // loop_header
      %s17 = sphi 0, %s21
      %p18 = scmp.ge.s32.totalorder %s17, 4
      %s27 = sphi 0, %s29
      %s30 = sphi 0, %s27
      %s31 = sphi 0, %s30
      %s47 = sphi 0, %s31
      %s51 = sphi 0, %s51
      %s53 = sphi 0, %s51
      %s54 = sphi 0, %s53
      %s68 = sphi 0, %s54
      %s72 = sphi 0, %s72
      %s74 = sphi 0, %s72
      %s75 = sphi 0, %s74
      %s89 = sphi 0, %s75
      %s93 = sphi 0, %s93
      %s95 = sphi 0, %s93
      %s96 = sphi 0, %s95
      %s110 = sphi 0, %s96
      %s116 = sphi 0, %s118
      %s119 = sphi 0, %s116
      %s120 = sphi 0, %s119
      %s136 = sphi 0, %s120
    $region4: #{tpu_custom_call.1} parent=1 // loop_header_branch
      %20 = sbr.rel (%p18) target = $region8
    $region5: #{tpu_custom_call.1} parent=1 // loop_body
      %s22 = ssub.s32 %s17, 1
      %s23 = ssub.s32 %s17, 2
      %s24 = sadd.s32 %s17, 1
      %s25 = ssub.s32 %s17, %s24
      %p26 = scmp.eq.s32.totalorder %s25, 0
      %s28 = sadd.s32 %s27, 1
      %s29 = scalar_select %p26, %s27, %s28
      %p32 = pneg %p26
      %p33 = scmp.eq.s32.totalorder %s17, 1
      %p34 = por %p32, %p33
      %p35 = scmp.ne.s32.totalorder %s27, %s30
      %p36 = scmp.eq.s32.totalorder %s17, 0
      %p37 = por %p35, %p36
      %p38 = scmp.ne.s32.totalorder %s27, %s30
      %p39 = scmp.eq.s32.totalorder %s22, 1
      %p40 = por %p38, %p39
      %p41 = scmp.ne.s32.totalorder %s30, %s31
      %p42 = scmp.eq.s32.totalorder %s22, 0
      %p43 = por %p41, %p42
      %p44 = scmp.ne.s32.totalorder %s30, %s31
      %p45 = scmp.eq.s32.totalorder %s23, 1
      %p46 = por %p44, %p45
      %p48 = scmp.ne.s32.totalorder %s31, %s47
      %p49 = scmp.eq.s32.totalorder %s23, 0
      %p50 = por %p48, %p49
      %s52 = sadd.s32 %s51, 1
      %p55 = scmp.eq.s32.totalorder %s17, 1
      %p56 = scmp.ne.s32.totalorder %s51, %s53
      %p57 = scmp.eq.s32.totalorder %s17, 0
      %p58 = por %p56, %p57
      %p59 = scmp.ne.s32.totalorder %s51, %s53
      %p60 = scmp.eq.s32.totalorder %s22, 1
      %p61 = por %p59, %p60
      %p62 = scmp.ne.s32.totalorder %s53, %s54
      %p63 = scmp.eq.s32.totalorder %s22, 0
      %p64 = por %p62, %p63
      %p65 = scmp.ne.s32.totalorder %s53, %s54
      %p66 = scmp.eq.s32.totalorder %s23, 1
      %p67 = por %p65, %p66
      %p69 = scmp.ne.s32.totalorder %s54, %s68
      %p70 = scmp.eq.s32.totalorder %s23, 0
      %p71 = por %p69, %p70
      %s73 = sadd.s32 %s72, 1
      %p76 = scmp.eq.s32.totalorder %s17, 1
      %p77 = scmp.ne.s32.totalorder %s72, %s74
      %p78 = scmp.eq.s32.totalorder %s17, 0
      %p79 = por %p77, %p78
      %p80 = scmp.ne.s32.totalorder %s72, %s74
      %p81 = scmp.eq.s32.totalorder %s22, 1
      %p82 = por %p80, %p81
      %p83 = scmp.ne.s32.totalorder %s74, %s75
      %p84 = scmp.eq.s32.totalorder %s22, 0
      %p85 = por %p83, %p84
      %p86 = scmp.ne.s32.totalorder %s74, %s75
      %p87 = scmp.eq.s32.totalorder %s23, 1
      %p88 = por %p86, %p87
      %p90 = scmp.ne.s32.totalorder %s75, %s89
      %p91 = scmp.eq.s32.totalorder %s23, 0
      %p92 = por %p90, %p91
      %s94 = sadd.s32 %s93, 1
      %p97 = scmp.eq.s32.totalorder %s17, 1
      %p98 = scmp.ne.s32.totalorder %s93, %s95
      %p99 = scmp.eq.s32.totalorder %s17, 0
      %p100 = por %p98, %p99
      %p101 = scmp.ne.s32.totalorder %s93, %s95
      %p102 = scmp.eq.s32.totalorder %s22, 1
      %p103 = por %p101, %p102
      %p104 = scmp.ne.s32.totalorder %s95, %s96
      %p105 = scmp.eq.s32.totalorder %s22, 0
      %p106 = por %p104, %p105
      %p107 = scmp.ne.s32.totalorder %s95, %s96
      %p108 = scmp.eq.s32.totalorder %s23, 1
      %p109 = por %p107, %p108
      %p111 = scmp.ne.s32.totalorder %s96, %s110
      %p112 = scmp.eq.s32.totalorder %s23, 0
      %p113 = por %p111, %p112
      %s114 = ssub.s32 %s17, %s24
      %p115 = scmp.eq.s32.totalorder %s114, 0
      %s117 = sadd.s32 %s116, 1
      %s118 = scalar_select %p115, %s116, %s117
      %p121 = pneg %p115
      %p122 = scmp.eq.s32.totalorder %s17, 1
      %p123 = por %p121, %p122
      %p124 = scmp.ne.s32.totalorder %s116, %s119
      %p125 = scmp.eq.s32.totalorder %s17, 0
      %p126 = por %p124, %p125
      %p127 = scmp.ne.s32.totalorder %s116, %s119
      %p128 = scmp.eq.s32.totalorder %s22, 1
      %p129 = por %p127, %p128
      %p130 = scmp.ne.s32.totalorder %s119, %s120
      %p131 = scmp.eq.s32.totalorder %s22, 0
      %p132 = por %p130, %p131
      %p133 = scmp.ne.s32.totalorder %s119, %s120
      %p134 = scmp.eq.s32.totalorder %s23, 1
      %p135 = por %p133, %p134
      %p137 = scmp.ne.s32.totalorder %s120, %s136
      %p138 = scmp.eq.s32.totalorder %s23, 0
      %p139 = por %p137, %p138
      %p140 = scmp.le.s32.totalorder 1, %s17
      %p141 = scmp.lt.s32.totalorder %s17, 3
      %p142 = pnand %p140, %p141
      %p143 = pneg %p142
      // Predicated region
      $region9: #{tpu_custom_call.1} parent=5 // pred_check
        _
      $region10: #{tpu_custom_call.1} parent=5 // pred_check_branch
        %145 = sbr.rel (%p142) target = $region12
      $region11: #{tpu_custom_call.1} parent=5 // pred_region
        %s146 = ssub.s32 %s17, 1
        // Predicated region
        $region13: #{tpu_custom_call.1} parent=11 // pred_check
          %p147 = pneg %p64
        $region14: #{tpu_custom_call.1} parent=11 // pred_check_branch
          %149 = sbr.rel (%p147) target = $region16
        $region15: #{tpu_custom_call.1} parent=11 // pred_region
          %s151 = ssub.s32 2048, 2048
          %152 = vsyncadd [#allocation6], %s151
          %s153 = sshll.u32 [#allocation5], 4
          %s154 = int_to_ptr.vmem [resolvable:$true] %s153
          %159 = dma.hbm_to_vmem [thread:$0]  %s1, 2048, %s154, [#allocation6], 128, 128, 8
        $region16: #{tpu_custom_call.1} parent=11 // pred_fallthru
          _
        // Predicated region
        $region17: #{tpu_custom_call.1} parent=11 // pred_check
          %p160 = pneg %p85
        $region18: #{tpu_custom_call.1} parent=11 // pred_check_branch
          %162 = sbr.rel (%p160) target = $region20
        $region19: #{tpu_custom_call.1} parent=11 // pred_region
          _
        $region20: #{tpu_custom_call.1} parent=11 // pred_fallthru
          _
        // Predicated region
        $region21: #{tpu_custom_call.1} parent=11 // pred_check
          %p163 = pneg %p106
        $region22: #{tpu_custom_call.1} parent=11 // pred_check_branch
          %165 = sbr.rel (%p163) target = $region24
        $region23: #{tpu_custom_call.1} parent=11 // pred_region
          _
        $region24: #{tpu_custom_call.1} parent=11 // pred_fallthru
          _
      $region12: #{tpu_custom_call.1} parent=5 // pred_fallthru
        _
      %p166 = scmp.lt.s32.totalorder %s17, 2
      // Predicated region
      $region25: #{tpu_custom_call.1} parent=5 // pred_check
        %p167 = pneg %p166
      $region26: #{tpu_custom_call.1} parent=5 // pred_check_branch
        %169 = sbr.rel (%p167) target = $region28
      $region27: #{tpu_custom_call.1} parent=5 // pred_region
        // Predicated region
        $region29: #{tpu_custom_call.1} parent=27 // pred_check
          %p170 = pneg %p37
        $region30: #{tpu_custom_call.1} parent=27 // pred_check_branch
          %172 = sbr.rel (%p170) target = $region32
        $region31: #{tpu_custom_call.1} parent=27 // pred_region
          %s173 = sand.u32 %s27, 1
          %s174 = scalar_lea.sflag [#allocation3], %s173
          %s175 = sand.u32 %s27, 1
          %s176 = smul.addr %s175, 128
          %s177 = scalar_lea.vmem [#allocation2], %s176
          %s179 = ssub.s32 2048, 2048
          %180 = vsyncadd %s174, %s179
          %s181 = smul.addr %s17, 32
          %s182 = smul.addr %s181, 64
          %s183 = scalar_lea.hbm %s0, %s182
          %s184 = sshll.u32 %s177, 4
          %s185 = int_to_ptr.vmem [resolvable:$true] %s184
          %190 = dma.hbm_to_vmem [thread:$0]  %s183, 2048, %s185, %s174, 64, 64, 4
        $region32: #{tpu_custom_call.1} parent=27 // pred_fallthru
          _
      $region28: #{tpu_custom_call.1} parent=5 // pred_fallthru
        _
      %p191 = scmp.le.s32.totalorder 1, %s17
      %p192 = scmp.lt.s32.totalorder %s17, 3
      %p193 = pnand %p191, %p192
      %p194 = pneg %p193
      // Predicated region
      $region33: #{tpu_custom_call.1} parent=5 // pred_check
        _
      $region34: #{tpu_custom_call.1} parent=5 // pred_check_branch
        %196 = sbr.rel (%p193) target = $region36
      $region35: #{tpu_custom_call.1} parent=5 // pred_region
        %s197 = ssub.s32 %s17, 1
        %s198 = sand.u32 %s30, 1
        %s199 = scalar_lea.sflag [#allocation3], %s198
        %s200 = sand.u32 %s30, 1
        %s201 = smul.addr %s200, 128
        %s202 = scalar_lea.vmem [#allocation2], %s201
        // Predicated region
        $region37: #{tpu_custom_call.1} parent=35 // pred_check
          %p203 = pneg %p43
        $region38: #{tpu_custom_call.1} parent=35 // pred_check_branch
          %205 = sbr.rel (%p203) target = $region40
        $region39: #{tpu_custom_call.1} parent=35 // pred_region
          %206 = dma.done %s199, 2048
        $region40: #{tpu_custom_call.1} parent=35 // pred_fallthru
          _
        // Predicated region
        $region41: #{tpu_custom_call.1} parent=35 // pred_check
          %p207 = pneg %p64
        $region42: #{tpu_custom_call.1} parent=35 // pred_check_branch
          %209 = sbr.rel (%p207) target = $region44
        $region43: #{tpu_custom_call.1} parent=35 // pred_region
          %210 = dma.done [#allocation6], 2048
        $region44: #{tpu_custom_call.1} parent=35 // pred_fallthru
          _
        %s211 = sand.u32 %s30, 1
        %s212 = scalar_lea.sflag [#allocation3], %s211
        %s213 = sand.u32 %s30, 1
        %s214 = smul.addr %s213, 128
        %s215 = scalar_lea.vmem [#allocation2], %s214
        %p216 = pneg %p43
        %p217 = pneg %p40
        %p218 = pneg %p64
        %p219 = pneg %p61
        %p220 = pneg %p85
        %p221 = pneg %p82
        %p222 = pneg %p106
        %p223 = pneg %p103
        %p224 = pneg %p132
        %p225 = pneg %p129
        %s226 = sand.u32 %s119, 1
        %s227 = scalar_lea.sflag [#allocation4], %s226
        %s228 = sand.u32 %s119, 1
        %s229 = smul.addr %s228, 128
        %s230 = scalar_lea.vmem [#allocation7], %s229
        %v231 = vld [vmem:[%s202] sm:$0xf]
        %v232 = vld [vmem:[%s202 + $0x4] sm:$0xf]
        %v233 = vld [vmem:[%s202 + $0x8] sm:$0xf]
        %v234 = vld [vmem:[%s202 + $0xc] sm:$0xf]
        %v235 = vld [vmem:[%s202 + $0x10] sm:$0xf]
        %v236 = vld [vmem:[%s202 + $0x14] sm:$0xf]
        %v237 = vld [vmem:[%s202 + $0x18] sm:$0xf]
        %v238 = vld [vmem:[%s202 + $0x1c] sm:$0xf]
        %v239 = vld [vmem:[%s202 + $0x20] sm:$0xf]
        %v240 = vld [vmem:[%s202 + $0x24] sm:$0xf]
        %v241 = vld [vmem:[%s202 + $0x28] sm:$0xf]
        %v242 = vld [vmem:[%s202 + $0x2c] sm:$0xf]
        %v243 = vld [vmem:[%s202 + $0x30] sm:$0xf]
        %v244 = vld [vmem:[%s202 + $0x34] sm:$0xf]
        %v245 = vld [vmem:[%s202 + $0x38] sm:$0xf]
        %v246 = vld [vmem:[%s202 + $0x3c] sm:$0xf]
        %v247 = vld [vmem:[%s202 + $0x40] sm:$0xf]
        %v248 = vld [vmem:[%s202 + $0x44] sm:$0xf]
        %v249 = vld [vmem:[%s202 + $0x48] sm:$0xf]
        %v250 = vld [vmem:[%s202 + $0x4c] sm:$0xf]
        %v251 = vld [vmem:[%s202 + $0x50] sm:$0xf]
        %v252 = vld [vmem:[%s202 + $0x54] sm:$0xf]
        %v253 = vld [vmem:[%s202 + $0x58] sm:$0xf]
        %v254 = vld [vmem:[%s202 + $0x5c] sm:$0xf]
        %v255 = vld [vmem:[%s202 + $0x60] sm:$0xf]
        %v256 = vld [vmem:[%s202 + $0x64] sm:$0xf]
        %v257 = vld [vmem:[%s202 + $0x68] sm:$0xf]
        %v258 = vld [vmem:[%s202 + $0x6c] sm:$0xf]
        %v259 = vld [vmem:[%s202 + $0x70] sm:$0xf]
        %v260 = vld [vmem:[%s202 + $0x74] sm:$0xf]
        %v261 = vld [vmem:[%s202 + $0x78] sm:$0xf]
        %v262 = vld [vmem:[%s202 + $0x7c] sm:$0xf]
        %v263 = vunpack.c.l.bf16 %v231
        %v264 = vunpack.c.l.bf16 %v232
        %v265 = vunpack.c.l.bf16 %v233
        %v266 = vunpack.c.l.bf16 %v234
        %v267 = vunpack.c.l.bf16 %v235
        %v268 = vunpack.c.l.bf16 %v236
        %v269 = vunpack.c.l.bf16 %v237
        %v270 = vunpack.c.l.bf16 %v238
        %v271 = vunpack.c.l.bf16 %v239
        %v272 = vunpack.c.l.bf16 %v240
        %v273 = vunpack.c.l.bf16 %v241
        %v274 = vunpack.c.l.bf16 %v242
        %v275 = vunpack.c.l.bf16 %v243
        %v276 = vunpack.c.l.bf16 %v244
        %v277 = vunpack.c.l.bf16 %v245
        %v278 = vunpack.c.l.bf16 %v246
        %v279 = vunpack.c.l.bf16 %v247
        %v280 = vunpack.c.l.bf16 %v248
        %v281 = vunpack.c.l.bf16 %v249
        %v282 = vunpack.c.l.bf16 %v250
        %v283 = vunpack.c.l.bf16 %v251
        %v284 = vunpack.c.l.bf16 %v252
        %v285 = vunpack.c.l.bf16 %v253
        %v286 = vunpack.c.l.bf16 %v254
        %v287 = vunpack.c.l.bf16 %v255
        %v288 = vunpack.c.l.bf16 %v256
        %v289 = vunpack.c.l.bf16 %v257
        %v290 = vunpack.c.l.bf16 %v258
        %v291 = vunpack.c.l.bf16 %v259
        %v292 = vunpack.c.l.bf16 %v260
        %v293 = vunpack.c.l.bf16 %v261
        %v294 = vunpack.c.l.bf16 %v262
        %v295 = vadd.f32 %v263, %v264
        %v296 = vadd.f32 %v295, %v265
        %v297 = vadd.f32 %v296, %v266
        %v298 = vadd.f32 %v297, %v267
        %v299 = vadd.f32 %v298, %v268
        %v300 = vadd.f32 %v299, %v269
        %v301 = vadd.f32 %v300, %v270
        %v302 = vadd.f32 %v301, %v271
        %v303 = vadd.f32 %v302, %v272
        %v304 = vadd.f32 %v303, %v273
        %v305 = vadd.f32 %v304, %v274
        %v306 = vadd.f32 %v305, %v275
        %v307 = vadd.f32 %v306, %v276
        %v308 = vadd.f32 %v307, %v277
        %v309 = vadd.f32 %v308, %v278
        %v310 = vadd.f32 %v309, %v279
        %v311 = vadd.f32 %v310, %v280
        %v312 = vadd.f32 %v311, %v281
        %v313 = vadd.f32 %v312, %v282
        %v314 = vadd.f32 %v313, %v283
        %v315 = vadd.f32 %v314, %v284
        %v316 = vadd.f32 %v315, %v285
        %v317 = vadd.f32 %v316, %v286
        %v318 = vadd.f32 %v317, %v287
        %v319 = vadd.f32 %v318, %v288
        %v320 = vadd.f32 %v319, %v289
        %v321 = vadd.f32 %v320, %v290
        %v322 = vadd.f32 %v321, %v291
        %v323 = vadd.f32 %v322, %v292
        %v324 = vadd.f32 %v323, %v293
        %v325 = vadd.f32 %v324, %v294
        %v326 = vrot.slane %v325, 4
        %v327 = vadd.f32 %v325, %v326
        %v328 = vrot.slane %v327, 2
        %v329 = vadd.f32 %v327, %v328
        %v330 = vrot.slane %v329, 1
        %v331 = vadd.f32 %v329, %v330
        %v332 = vmul.f32 %v263, %v263
        %v333 = vmul.f32 %v264, %v264
        %v334 = vmul.f32 %v265, %v265
        %v335 = vmul.f32 %v266, %v266
        %v336 = vmul.f32 %v267, %v267
        %v337 = vmul.f32 %v268, %v268
        %v338 = vmul.f32 %v269, %v269
        %v339 = vmul.f32 %v270, %v270
        %v340 = vmul.f32 %v271, %v271
        %v341 = vmul.f32 %v272, %v272
        %v342 = vmul.f32 %v273, %v273
        %v343 = vmul.f32 %v274, %v274
        %v344 = vmul.f32 %v275, %v275
        %v345 = vmul.f32 %v276, %v276
        %v346 = vmul.f32 %v277, %v277
        %v347 = vmul.f32 %v278, %v278
        %v348 = vmul.f32 %v279, %v279
        %v349 = vmul.f32 %v280, %v280
        %v350 = vmul.f32 %v281, %v281
        %v351 = vmul.f32 %v282, %v282
        %v352 = vmul.f32 %v283, %v283
        %v353 = vmul.f32 %v284, %v284
        %v354 = vmul.f32 %v285, %v285
        %v355 = vmul.f32 %v286, %v286
        %v356 = vmul.f32 %v287, %v287
        %v357 = vmul.f32 %v288, %v288
        %v358 = vmul.f32 %v289, %v289
        %v359 = vmul.f32 %v290, %v290
        %v360 = vmul.f32 %v291, %v291
        %v361 = vmul.f32 %v292, %v292
        %v362 = vmul.f32 %v293, %v293
        %v363 = vmul.f32 %v294, %v294
        %v364 = vadd.f32 %v332, %v333
        %v365 = vadd.f32 %v364, %v334
        %v366 = vadd.f32 %v365, %v335
        %v367 = vadd.f32 %v366, %v336
        %v368 = vadd.f32 %v367, %v337
        %v369 = vadd.f32 %v368, %v338
        %v370 = vadd.f32 %v369, %v339
        %v371 = vadd.f32 %v370, %v340
        %v372 = vadd.f32 %v371, %v341
        %v373 = vadd.f32 %v372, %v342
        %v374 = vadd.f32 %v373, %v343
        %v375 = vadd.f32 %v374, %v344
        %v376 = vadd.f32 %v375, %v345
        %v377 = vadd.f32 %v376, %v346
        %v378 = vadd.f32 %v377, %v347
        %v379 = vadd.f32 %v378, %v348
        %v380 = vadd.f32 %v379, %v349
        %v381 = vadd.f32 %v380, %v350
        %v382 = vadd.f32 %v381, %v351
        %v383 = vadd.f32 %v382, %v352
        %v384 = vadd.f32 %v383, %v353
        %v385 = vadd.f32 %v384, %v354
        %v386 = vadd.f32 %v385, %v355
        %v387 = vadd.f32 %v386, %v356
        %v388 = vadd.f32 %v387, %v357
        %v389 = vadd.f32 %v388, %v358
        %v390 = vadd.f32 %v389, %v359
        %v391 = vadd.f32 %v390, %v360
        %v392 = vadd.f32 %v391, %v361
        %v393 = vadd.f32 %v392, %v362
        %v394 = vadd.f32 %v393, %v363
        %v395 = vrot.slane %v394, 4
        %v396 = vadd.f32 %v394, %v395
        %v397 = vrot.slane %v396, 2
        %v398 = vadd.f32 %v396, %v397
        %v399 = vrot.slane %v398, 1
        %v400 = vadd.f32 %v398, %v399
        %v401 = vld [vmem:[#allocation5] sm:$0xff]
        %v402 = vld [vmem:[#allocation5 + $0x8] sm:$0xff]
        %v403 = vld [vmem:[#allocation5 + $0x10] sm:$0xff]
        %v404 = vld [vmem:[#allocation5 + $0x18] sm:$0xff]
        %v405 = vld [vmem:[#allocation5 + $0x20] sm:$0xff]
        %v406 = vld [vmem:[#allocation5 + $0x28] sm:$0xff]
        %v407 = vld [vmem:[#allocation5 + $0x30] sm:$0xff]
        %v408 = vld [vmem:[#allocation5 + $0x38] sm:$0xff]
        %v409 = vld [vmem:[#allocation5 + $0x40] sm:$0xff]
        %v410 = vld [vmem:[#allocation5 + $0x48] sm:$0xff]
        %v411 = vld [vmem:[#allocation5 + $0x50] sm:$0xff]
        %v412 = vld [vmem:[#allocation5 + $0x58] sm:$0xff]
        %v413 = vld [vmem:[#allocation5 + $0x60] sm:$0xff]
        %v414 = vld [vmem:[#allocation5 + $0x68] sm:$0xff]
        %v415 = vld [vmem:[#allocation5 + $0x70] sm:$0xff]
        %v416 = vld [vmem:[#allocation5 + $0x78] sm:$0xff]
        %417 = vmatprep.subr.mxu0 0.0
        %418 = vmatpush1.msra.mxu0 %v416
        %419 = vmatprep.subr.mxu0 0.0
        %420 = vmatpush1.msra.mxu0 %v415
        %421 = vmatprep.subr.mxu0 0.0
        %422 = vmatpush1.msra.mxu0 %v414
        %423 = vmatprep.subr.mxu0 0.0
        %424 = vmatpush1.msra.mxu0 %v413
        %425 = vmatprep.subr.mxu0 0.0
        %426 = vmatpush1.msra.mxu0 %v412
        %427 = vmatprep.subr.mxu0 0.0
        %428 = vmatpush1.msra.mxu0 %v411
        %429 = vmatprep.subr.mxu0 0.0
        %430 = vmatpush1.msra.mxu0 %v410
        %431 = vmatprep.subr.mxu0 0.0
        %432 = vmatpush1.msra.mxu0 %v409
        %433 = vmatprep.subr.mxu0 0.0
        %434 = vmatpush1.msra.mxu0 %v408
        %435 = vmatprep.subr.mxu0 0.0
        %436 = vmatpush1.msra.mxu0 %v407
        %437 = vmatprep.subr.mxu0 0.0
        %438 = vmatpush1.msra.mxu0 %v406
        %439 = vmatprep.subr.mxu0 0.0
        %440 = vmatpush1.msra.mxu0 %v405
        %441 = vmatprep.subr.mxu0 0.0
        %442 = vmatpush1.msra.mxu0 %v404
        %443 = vmatprep.subr.mxu0 0.0
        %444 = vmatpush1.msra.mxu0 %v403
        %445 = vmatprep.subr.mxu0 0.0
        %446 = vmatpush1.msra.mxu0 %v402
        %447 = vmatprep.subr.mxu0 0.0
        %448 = vmatpush1.msra.mxu0 %v401
        %449 = vmatprep.subr.mxu0 0.0
        %450 = vmatpush2.msra.mxu0 0.0
        %451 = vmatprep.subr.mxu0 0.0
        %452 = vmatpush2.msra.mxu0 0.0
        %453 = vmatprep.subr.mxu0 0.0
        %454 = vmatpush2.msra.mxu0 0.0
        %455 = vmatprep.subr.mxu0 0.0
        %456 = vmatpush2.msra.mxu0 0.0
        %457 = vmatprep.subr.mxu0 0.0
        %458 = vmatpush2.msra.mxu0 0.0
        %459 = vmatprep.subr.mxu0 0.0
        %460 = vmatpush2.msra.mxu0 0.0
        %461 = vmatprep.subr.mxu0 0.0
        %462 = vmatpush2.msra.mxu0 0.0
        %463 = vmatprep.subr.mxu0 0.0
        %464 = vmatpush2.msra.mxu0 0.0
        %465 = vmatprep.subr.mxu0 0.0
        %466 = vmatpush2.msra.mxu0 0.0
        %467 = vmatprep.subr.mxu0 0.0
        %468 = vmatpush2.msra.mxu0 0.0
        %469 = vmatprep.subr.mxu0 0.0
        %470 = vmatpush2.msra.mxu0 0.0
        %471 = vmatprep.subr.mxu0 0.0
        %472 = vmatpush2.msra.mxu0 0.0
        %473 = vmatprep.subr.mxu0 0.0
        %474 = vmatpush2.msra.mxu0 0.0
        %475 = vmatprep.subr.mxu0 0.0
        %476 = vmatpush2.msra.mxu0 0.0
        %477 = vmatprep.subr.mxu0 0.0
        %478 = vmatpush2.msra.mxu0 0.0
        %479 = vmatprep.subr.mxu0 0.0
        %480 = vmatpush2.msra.mxu0 0.0
        %481 = vmatprep.mubr.f32.mxu0 0.0
        %482 = vmatmul.mubr.f32.gmra.mxu0 %v331
        %v483 = vpop.f32.mrf.mxu0
        %v484 = vadd.f32 0.0, %v483
        %v485 = vpop.f32.mrf.mxu0
        %486 = vdwg.mxu0
        %487 = vmatprep.subr.mxu0 0.0
        %488 = vmatpush1.msra.mxu0 %v416
        %489 = vmatprep.subr.mxu0 0.0
        %490 = vmatpush1.msra.mxu0 %v415
        %491 = vmatprep.subr.mxu0 0.0
        %492 = vmatpush1.msra.mxu0 %v414
        %493 = vmatprep.subr.mxu0 0.0
        %494 = vmatpush1.msra.mxu0 %v413
        %495 = vmatprep.subr.mxu0 0.0
        %496 = vmatpush1.msra.mxu0 %v412
        %497 = vmatprep.subr.mxu0 0.0
        %498 = vmatpush1.msra.mxu0 %v411
        %499 = vmatprep.subr.mxu0 0.0
        %500 = vmatpush1.msra.mxu0 %v410
        %501 = vmatprep.subr.mxu0 0.0
        %502 = vmatpush1.msra.mxu0 %v409
        %503 = vmatprep.subr.mxu0 0.0
        %504 = vmatpush1.msra.mxu0 %v408
        %505 = vmatprep.subr.mxu0 0.0
        %506 = vmatpush1.msra.mxu0 %v407
        %507 = vmatprep.subr.mxu0 0.0
        %508 = vmatpush1.msra.mxu0 %v406
        %509 = vmatprep.subr.mxu0 0.0
        %510 = vmatpush1.msra.mxu0 %v405
        %511 = vmatprep.subr.mxu0 0.0
        %512 = vmatpush1.msra.mxu0 %v404
        %513 = vmatprep.subr.mxu0 0.0
        %514 = vmatpush1.msra.mxu0 %v403
        %515 = vmatprep.subr.mxu0 0.0
        %516 = vmatpush1.msra.mxu0 %v402
        %517 = vmatprep.subr.mxu0 0.0
        %518 = vmatpush1.msra.mxu0 %v401
        %519 = vmatprep.subr.mxu0 0.0
        %520 = vmatpush2.msra.mxu0 0.0
        %521 = vmatprep.subr.mxu0 0.0
        %522 = vmatpush2.msra.mxu0 0.0
        %523 = vmatprep.subr.mxu0 0.0
        %524 = vmatpush2.msra.mxu0 0.0
        %525 = vmatprep.subr.mxu0 0.0
        %526 = vmatpush2.msra.mxu0 0.0
        %527 = vmatprep.subr.mxu0 0.0
        %528 = vmatpush2.msra.mxu0 0.0
        %529 = vmatprep.subr.mxu0 0.0
        %530 = vmatpush2.msra.mxu0 0.0
        %531 = vmatprep.subr.mxu0 0.0
        %532 = vmatpush2.msra.mxu0 0.0
        %533 = vmatprep.subr.mxu0 0.0
        %534 = vmatpush2.msra.mxu0 0.0
        %535 = vmatprep.subr.mxu0 0.0
        %536 = vmatpush2.msra.mxu0 0.0
        %537 = vmatprep.subr.mxu0 0.0
        %538 = vmatpush2.msra.mxu0 0.0
        %539 = vmatprep.subr.mxu0 0.0
        %540 = vmatpush2.msra.mxu0 0.0
        %541 = vmatprep.subr.mxu0 0.0
        %542 = vmatpush2.msra.mxu0 0.0
        %543 = vmatprep.subr.mxu0 0.0
        %544 = vmatpush2.msra.mxu0 0.0
        %545 = vmatprep.subr.mxu0 0.0
        %546 = vmatpush2.msra.mxu0 0.0
        %547 = vmatprep.subr.mxu0 0.0
        %548 = vmatpush2.msra.mxu0 0.0
        %549 = vmatprep.subr.mxu0 0.0
        %550 = vmatpush2.msra.mxu0 0.0
        %551 = vmatprep.mubr.f32.mxu0 0.0
        %552 = vmatmul.mubr.f32.gmra.mxu0 %v400
        %v553 = vpop.f32.mrf.mxu0
        %v554 = vadd.f32 0.0, %v553
        %v555 = vpop.f32.mrf.mxu0
        %556 = vdwg.mxu0
        %v557 = vmul.f32 %v484, %v484
        %v558 = vsub.f32 %v554, %v557
        %v559 = vadd.f32 %v558, 1e-06
        %v560 = vrsqrt.pop %v559
        %v561 = vld [vmem:[%s2] sm:$0x1]
        %v562 = vmul.f32 %v561, %v560
        %v563 = vld [vmem:[%s3] sm:$0x1]
        %v564 = vmul.f32 %v484, %v562
        %v565 = vsub.f32 %v563, %v564
        %v567 = vlaneseq
        %v568 = vshrl.u32 %v567, 7
        %v569 = vsub.s32 0, %v568
        %v570 = vrot.slane %v562, %v569
        %v572 = vmul.f32 %v263, %v570
        %v573 = vmul.f32 %v264, %v570
        %v574 = vmul.f32 %v265, %v570
        %v575 = vmul.f32 %v266, %v570
        %v576 = vmul.f32 %v267, %v570
        %v577 = vmul.f32 %v268, %v570
        %v578 = vmul.f32 %v269, %v570
        %v579 = vmul.f32 %v270, %v570
        %v580 = vmul.f32 %v271, %v570
        %v581 = vmul.f32 %v272, %v570
        %v582 = vmul.f32 %v273, %v570
        %v583 = vmul.f32 %v274, %v570
        %v584 = vmul.f32 %v275, %v570
        %v585 = vmul.f32 %v276, %v570
        %v586 = vmul.f32 %v277, %v570
        %v587 = vmul.f32 %v278, %v570
        %v588 = vmul.f32 %v279, %v570
        %v589 = vmul.f32 %v280, %v570
        %v590 = vmul.f32 %v281, %v570
        %v591 = vmul.f32 %v282, %v570
        %v592 = vmul.f32 %v283, %v570
        %v593 = vmul.f32 %v284, %v570
        %v594 = vmul.f32 %v285, %v570
        %v595 = vmul.f32 %v286, %v570
        %v596 = vmul.f32 %v287, %v570
        %v597 = vmul.f32 %v288, %v570
        %v598 = vmul.f32 %v289, %v570
        %v599 = vmul.f32 %v290, %v570
        %v600 = vmul.f32 %v291, %v570
        %v601 = vmul.f32 %v292, %v570
        %v602 = vmul.f32 %v293, %v570
        %v603 = vmul.f32 %v294, %v570
        %v605 = vlaneseq
        %v606 = vshrl.u32 %v605, 7
        %v607 = vsub.s32 0, %v606
        %v608 = vrot.slane %v565, %v607
        %v610 = vadd.f32 %v572, %v608
        %v611 = vadd.f32 %v573, %v608
        %v612 = vadd.f32 %v574, %v608
        %v613 = vadd.f32 %v575, %v608
        %v614 = vadd.f32 %v576, %v608
        %v615 = vadd.f32 %v577, %v608
        %v616 = vadd.f32 %v578, %v608
        %v617 = vadd.f32 %v579, %v608
        %v618 = vadd.f32 %v580, %v608
        %v619 = vadd.f32 %v581, %v608
        %v620 = vadd.f32 %v582, %v608
        %v621 = vadd.f32 %v583, %v608
        %v622 = vadd.f32 %v584, %v608
        %v623 = vadd.f32 %v585, %v608
        %v624 = vadd.f32 %v586, %v608
        %v625 = vadd.f32 %v587, %v608
        %v626 = vadd.f32 %v588, %v608
        %v627 = vadd.f32 %v589, %v608
        %v628 = vadd.f32 %v590, %v608
        %v629 = vadd.f32 %v591, %v608
        %v630 = vadd.f32 %v592, %v608
        %v631 = vadd.f32 %v593, %v608
        %v632 = vadd.f32 %v594, %v608
        %v633 = vadd.f32 %v595, %v608
        %v634 = vadd.f32 %v596, %v608
        %v635 = vadd.f32 %v597, %v608
        %v636 = vadd.f32 %v598, %v608
        %v637 = vadd.f32 %v599, %v608
        %v638 = vadd.f32 %v600, %v608
        %v639 = vadd.f32 %v601, %v608
        %v640 = vadd.f32 %v602, %v608
        %v641 = vadd.f32 %v603, %v608
        %v642 = vsub.f32 0.0, %v610
        %v643 = vsub.f32 0.0, %v611
        %v644 = vsub.f32 0.0, %v612
        %v645 = vsub.f32 0.0, %v613
        %v646 = vsub.f32 0.0, %v614
        %v647 = vsub.f32 0.0, %v615
        %v648 = vsub.f32 0.0, %v616
        %v649 = vsub.f32 0.0, %v617
        %v650 = vsub.f32 0.0, %v618
        %v651 = vsub.f32 0.0, %v619
        %v652 = vsub.f32 0.0, %v620
        %v653 = vsub.f32 0.0, %v621
        %v654 = vsub.f32 0.0, %v622
        %v655 = vsub.f32 0.0, %v623
        %v656 = vsub.f32 0.0, %v624
        %v657 = vsub.f32 0.0, %v625
        %v658 = vsub.f32 0.0, %v626
        %v659 = vsub.f32 0.0, %v627
        %v660 = vsub.f32 0.0, %v628
        %v661 = vsub.f32 0.0, %v629
        %v662 = vsub.f32 0.0, %v630
        %v663 = vsub.f32 0.0, %v631
        %v664 = vsub.f32 0.0, %v632
        %v665 = vsub.f32 0.0, %v633
        %v666 = vsub.f32 0.0, %v634
        %v667 = vsub.f32 0.0, %v635
        %v668 = vsub.f32 0.0, %v636
        %v669 = vsub.f32 0.0, %v637
        %v670 = vsub.f32 0.0, %v638
        %v671 = vsub.f32 0.0, %v639
        %v672 = vsub.f32 0.0, %v640
        %v673 = vsub.f32 0.0, %v641
        %v674 = vmul.f32 %v642, 1.442695
        %v675 = vpow.pop %v674
        %v676 = vmul.f32 %v643, 1.442695
        %v677 = vpow.pop %v676
        %v678 = vmul.f32 %v644, 1.442695
        %v679 = vpow.pop %v678
        %v680 = vmul.f32 %v645, 1.442695
        %v681 = vpow.pop %v680
        %v682 = vmul.f32 %v646, 1.442695
        %v683 = vpow.pop %v682
        %v684 = vmul.f32 %v647, 1.442695
        %v685 = vpow.pop %v684
        %v686 = vmul.f32 %v648, 1.442695
        %v687 = vpow.pop %v686
        %v688 = vmul.f32 %v649, 1.442695
        %v689 = vpow.pop %v688
        %v690 = vmul.f32 %v650, 1.442695
        %v691 = vpow.pop %v690
        %v692 = vmul.f32 %v651, 1.442695
        %v693 = vpow.pop %v692
        %v694 = vmul.f32 %v652, 1.442695
        %v695 = vpow.pop %v694
        %v696 = vmul.f32 %v653, 1.442695
        %v697 = vpow.pop %v696
        %v698 = vmul.f32 %v654, 1.442695
        %v699 = vpow.pop %v698
        %v700 = vmul.f32 %v655, 1.442695
        %v701 = vpow.pop %v700
        %v702 = vmul.f32 %v656, 1.442695
        %v703 = vpow.pop %v702
        %v704 = vmul.f32 %v657, 1.442695
        %v705 = vpow.pop %v704
        %v706 = vmul.f32 %v658, 1.442695
        %v707 = vpow.pop %v706
        %v708 = vmul.f32 %v659, 1.442695
        %v709 = vpow.pop %v708
        %v710 = vmul.f32 %v660, 1.442695
        %v711 = vpow.pop %v710
        %v712 = vmul.f32 %v661, 1.442695
        %v713 = vpow.pop %v712
        %v714 = vmul.f32 %v662, 1.442695
        %v715 = vpow.pop %v714
        %v716 = vmul.f32 %v663, 1.442695
        %v717 = vpow.pop %v716
        %v718 = vmul.f32 %v664, 1.442695
        %v719 = vpow.pop %v718
        %v720 = vmul.f32 %v665, 1.442695
        %v721 = vpow.pop %v720
        %v722 = vmul.f32 %v666, 1.442695
        %v723 = vpow.pop %v722
        %v724 = vmul.f32 %v667, 1.442695
        %v725 = vpow.pop %v724
        %v726 = vmul.f32 %v668, 1.442695
        %v727 = vpow.pop %v726
        %v728 = vmul.f32 %v669, 1.442695
        %v729 = vpow.pop %v728
        %v730 = vmul.f32 %v670, 1.442695
        %v731 = vpow.pop %v730
        %v732 = vmul.f32 %v671, 1.442695
        %v733 = vpow.pop %v732
        %v734 = vmul.f32 %v672, 1.442695
        %v735 = vpow.pop %v734
        %v736 = vmul.f32 %v673, 1.442695
        %v737 = vpow.pop %v736
        %v738 = vadd.f32 %v675, 1.0
        %v739 = vadd.f32 %v677, 1.0
        %v740 = vadd.f32 %v679, 1.0
        %v741 = vadd.f32 %v681, 1.0
        %v742 = vadd.f32 %v683, 1.0
        %v743 = vadd.f32 %v685, 1.0
        %v744 = vadd.f32 %v687, 1.0
        %v745 = vadd.f32 %v689, 1.0
        %v746 = vadd.f32 %v691, 1.0
        %v747 = vadd.f32 %v693, 1.0
        %v748 = vadd.f32 %v695, 1.0
        %v749 = vadd.f32 %v697, 1.0
        %v750 = vadd.f32 %v699, 1.0
        %v751 = vadd.f32 %v701, 1.0
        %v752 = vadd.f32 %v703, 1.0
        %v753 = vadd.f32 %v705, 1.0
        %v754 = vadd.f32 %v707, 1.0
        %v755 = vadd.f32 %v709, 1.0
        %v756 = vadd.f32 %v711, 1.0
        %v757 = vadd.f32 %v713, 1.0
        %v758 = vadd.f32 %v715, 1.0
        %v759 = vadd.f32 %v717, 1.0
        %v760 = vadd.f32 %v719, 1.0
        %v761 = vadd.f32 %v721, 1.0
        %v762 = vadd.f32 %v723, 1.0
        %v763 = vadd.f32 %v725, 1.0
        %v764 = vadd.f32 %v727, 1.0
        %v765 = vadd.f32 %v729, 1.0
        %v766 = vadd.f32 %v731, 1.0
        %v767 = vadd.f32 %v733, 1.0
        %v768 = vadd.f32 %v735, 1.0
        %v769 = vadd.f32 %v737, 1.0
        %v770 = vrcp.pop %v738
        %v771 = vmul.f32 1.0, %v770
        %v772 = vrcp.pop %v739
        %v773 = vmul.f32 1.0, %v772
        %v774 = vrcp.pop %v740
        %v775 = vmul.f32 1.0, %v774
        %v776 = vrcp.pop %v741
        %v777 = vmul.f32 1.0, %v776
        %v778 = vrcp.pop %v742
        %v779 = vmul.f32 1.0, %v778
        %v780 = vrcp.pop %v743
        %v781 = vmul.f32 1.0, %v780
        %v782 = vrcp.pop %v744
        %v783 = vmul.f32 1.0, %v782
        %v784 = vrcp.pop %v745
        %v785 = vmul.f32 1.0, %v784
        %v786 = vrcp.pop %v746
        %v787 = vmul.f32 1.0, %v786
        %v788 = vrcp.pop %v747
        %v789 = vmul.f32 1.0, %v788
        %v790 = vrcp.pop %v748
        %v791 = vmul.f32 1.0, %v790
        %v792 = vrcp.pop %v749
        %v793 = vmul.f32 1.0, %v792
        %v794 = vrcp.pop %v750
        %v795 = vmul.f32 1.0, %v794
        %v796 = vrcp.pop %v751
        %v797 = vmul.f32 1.0, %v796
        %v798 = vrcp.pop %v752
        %v799 = vmul.f32 1.0, %v798
        %v800 = vrcp.pop %v753
        %v801 = vmul.f32 1.0, %v800
        %v802 = vrcp.pop %v754
        %v803 = vmul.f32 1.0, %v802
        %v804 = vrcp.pop %v755
        %v805 = vmul.f32 1.0, %v804
        %v806 = vrcp.pop %v756
        %v807 = vmul.f32 1.0, %v806
        %v808 = vrcp.pop %v757
        %v809 = vmul.f32 1.0, %v808
        %v810 = vrcp.pop %v758
        %v811 = vmul.f32 1.0, %v810
        %v812 = vrcp.pop %v759
        %v813 = vmul.f32 1.0, %v812
        %v814 = vrcp.pop %v760
        %v815 = vmul.f32 1.0, %v814
        %v816 = vrcp.pop %v761
        %v817 = vmul.f32 1.0, %v816
        %v818 = vrcp.pop %v762
        %v819 = vmul.f32 1.0, %v818
        %v820 = vrcp.pop %v763
        %v821 = vmul.f32 1.0, %v820
        %v822 = vrcp.pop %v764
        %v823 = vmul.f32 1.0, %v822
        %v824 = vrcp.pop %v765
        %v825 = vmul.f32 1.0, %v824
        %v826 = vrcp.pop %v766
        %v827 = vmul.f32 1.0, %v826
        %v828 = vrcp.pop %v767
        %v829 = vmul.f32 1.0, %v828
        %v830 = vrcp.pop %v768
        %v831 = vmul.f32 1.0, %v830
        %v832 = vrcp.pop %v769
        %v833 = vmul.f32 1.0, %v832
        %v834 = vmul.f32 %v610, %v771
        %v835 = vmul.f32 %v611, %v773
        %v836 = vmul.f32 %v612, %v775
        %v837 = vmul.f32 %v613, %v777
        %v838 = vmul.f32 %v614, %v779
        %v839 = vmul.f32 %v615, %v781
        %v840 = vmul.f32 %v616, %v783
        %v841 = vmul.f32 %v617, %v785
        %v842 = vmul.f32 %v618, %v787
        %v843 = vmul.f32 %v619, %v789
        %v844 = vmul.f32 %v620, %v791
        %v845 = vmul.f32 %v621, %v793
        %v846 = vmul.f32 %v622, %v795
        %v847 = vmul.f32 %v623, %v797
        %v848 = vmul.f32 %v624, %v799
        %v849 = vmul.f32 %v625, %v801
        %v850 = vmul.f32 %v626, %v803
        %v851 = vmul.f32 %v627, %v805
        %v852 = vmul.f32 %v628, %v807
        %v853 = vmul.f32 %v629, %v809
        %v854 = vmul.f32 %v630, %v811
        %v855 = vmul.f32 %v631, %v813
        %v856 = vmul.f32 %v632, %v815
        %v857 = vmul.f32 %v633, %v817
        %v858 = vmul.f32 %v634, %v819
        %v859 = vmul.f32 %v635, %v821
        %v860 = vmul.f32 %v636, %v823
        %v861 = vmul.f32 %v637, %v825
        %v862 = vmul.f32 %v638, %v827
        %v863 = vmul.f32 %v639, %v829
        %v864 = vmul.f32 %v640, %v831
        %v865 = vmul.f32 %v641, %v833
        %v866 = vpack.c.bf16 %v835, %v834
        %v867 = vpack.c.bf16 %v837, %v836
        %v868 = vpack.c.bf16 %v839, %v838
        %v869 = vpack.c.bf16 %v841, %v840
        %v870 = vpack.c.bf16 %v843, %v842
        %v871 = vpack.c.bf16 %v845, %v844
        %v872 = vpack.c.bf16 %v847, %v846
        %v873 = vpack.c.bf16 %v849, %v848
        %v874 = vpack.c.bf16 %v851, %v850
        %v875 = vpack.c.bf16 %v853, %v852
        %v876 = vpack.c.bf16 %v855, %v854
        %v877 = vpack.c.bf16 %v857, %v856
        %v878 = vpack.c.bf16 %v859, %v858
        %v879 = vpack.c.bf16 %v861, %v860
        %v880 = vpack.c.bf16 %v863, %v862
        %v881 = vpack.c.bf16 %v865, %v864
        %v898 = vunpack.c.l.b16 %v866
        %v899 = vunpack.c.h.b16 %v866
        %v900 = vunpack.c.l.b16 %v867
        %v901 = vunpack.c.h.b16 %v867
        %v902 = vunpack.c.l.b16 %v868
        %v903 = vunpack.c.h.b16 %v868
        %v904 = vunpack.c.l.b16 %v869
        %v905 = vunpack.c.h.b16 %v869
        %v906 = vunpack.c.l.b16 %v870
        %v907 = vunpack.c.h.b16 %v870
        %v908 = vunpack.c.l.b16 %v871
        %v909 = vunpack.c.h.b16 %v871
        %v910 = vunpack.c.l.b16 %v872
        %v911 = vunpack.c.h.b16 %v872
        %v912 = vunpack.c.l.b16 %v873
        %v913 = vunpack.c.h.b16 %v873
        %v914 = vunpack.c.l.b16 %v874
        %v915 = vunpack.c.h.b16 %v874
        %v916 = vunpack.c.l.b16 %v875
        %v917 = vunpack.c.h.b16 %v875
        %v918 = vunpack.c.l.b16 %v876
        %v919 = vunpack.c.h.b16 %v876
        %v920 = vunpack.c.l.b16 %v877
        %v921 = vunpack.c.h.b16 %v877
        %v922 = vunpack.c.l.b16 %v878
        %v923 = vunpack.c.h.b16 %v878
        %v924 = vunpack.c.l.b16 %v879
        %v925 = vunpack.c.h.b16 %v879
        %v926 = vunpack.c.l.b16 %v880
        %v927 = vunpack.c.h.b16 %v880
        %v928 = vunpack.c.l.b16 %v881
        %v929 = vunpack.c.h.b16 %v881
        %v930 = vpack.c.b16 %v898, %v898
        %v931 = vpack.c.b16 %v899, %v899
        %v932 = vpack.c.b16 %v900, %v900
        %v933 = vpack.c.b16 %v901, %v901
        %v934 = vpack.c.b16 %v902, %v902
        %v935 = vpack.c.b16 %v903, %v903
        %v936 = vpack.c.b16 %v904, %v904
        %v937 = vpack.c.b16 %v905, %v905
        %v938 = vpack.c.b16 %v906, %v906
        %v939 = vpack.c.b16 %v907, %v907
        %v940 = vpack.c.b16 %v908, %v908
        %v941 = vpack.c.b16 %v909, %v909
        %v942 = vpack.c.b16 %v910, %v910
        %v943 = vpack.c.b16 %v911, %v911
        %v944 = vpack.c.b16 %v912, %v912
        %v945 = vpack.c.b16 %v913, %v913
        %v946 = vpack.c.b16 %v914, %v914
        %v947 = vpack.c.b16 %v915, %v915
        %v948 = vpack.c.b16 %v916, %v916
        %v949 = vpack.c.b16 %v917, %v917
        %v950 = vpack.c.b16 %v918, %v918
        %v951 = vpack.c.b16 %v919, %v919
        %v952 = vpack.c.b16 %v920, %v920
        %v953 = vpack.c.b16 %v921, %v921
        %v954 = vpack.c.b16 %v922, %v922
        %v955 = vpack.c.b16 %v923, %v923
        %v956 = vpack.c.b16 %v924, %v924
        %v957 = vpack.c.b16 %v925, %v925
        %v958 = vpack.c.b16 %v926, %v926
        %v959 = vpack.c.b16 %v927, %v927
        %v960 = vpack.c.b16 %v928, %v928
        %v961 = vpack.c.b16 %v929, %v929
        %994 = vst [vmem:[%s230] sm:$0xf] %v930
        %995 = vst [vmem:[%s230 + $0x4] sm:$0xf] %v931
        %996 = vst [vmem:[%s230 + $0x8] sm:$0xf] %v932
        %997 = vst [vmem:[%s230 + $0xc] sm:$0xf] %v933
        %998 = vst [vmem:[%s230 + $0x10] sm:$0xf] %v934
        %999 = vst [vmem:[%s230 + $0x14] sm:$0xf] %v935
        %1000 = vst [vmem:[%s230 + $0x18] sm:$0xf] %v936
        %1001 = vst [vmem:[%s230 + $0x1c] sm:$0xf] %v937
        %1002 = vst [vmem:[%s230 + $0x20] sm:$0xf] %v938
        %1003 = vst [vmem:[%s230 + $0x24] sm:$0xf] %v939
        %1004 = vst [vmem:[%s230 + $0x28] sm:$0xf] %v940
        %1005 = vst [vmem:[%s230 + $0x2c] sm:$0xf] %v941
        %1006 = vst [vmem:[%s230 + $0x30] sm:$0xf] %v942
        %1007 = vst [vmem:[%s230 + $0x34] sm:$0xf] %v943
        %1008 = vst [vmem:[%s230 + $0x38] sm:$0xf] %v944
        %1009 = vst [vmem:[%s230 + $0x3c] sm:$0xf] %v945
        %1010 = vst [vmem:[%s230 + $0x40] sm:$0xf] %v946
        %1011 = vst [vmem:[%s230 + $0x44] sm:$0xf] %v947
        %1012 = vst [vmem:[%s230 + $0x48] sm:$0xf] %v948
        %1013 = vst [vmem:[%s230 + $0x4c] sm:$0xf] %v949
        %1014 = vst [vmem:[%s230 + $0x50] sm:$0xf] %v950
        %1015 = vst [vmem:[%s230 + $0x54] sm:$0xf] %v951
        %1016 = vst [vmem:[%s230 + $0x58] sm:$0xf] %v952
        %1017 = vst [vmem:[%s230 + $0x5c] sm:$0xf] %v953
        %1018 = vst [vmem:[%s230 + $0x60] sm:$0xf] %v954
        %1019 = vst [vmem:[%s230 + $0x64] sm:$0xf] %v955
        %1020 = vst [vmem:[%s230 + $0x68] sm:$0xf] %v956
        %1021 = vst [vmem:[%s230 + $0x6c] sm:$0xf] %v957
        %1022 = vst [vmem:[%s230 + $0x70] sm:$0xf] %v958
        %1023 = vst [vmem:[%s230 + $0x74] sm:$0xf] %v959
        %1024 = vst [vmem:[%s230 + $0x78] sm:$0xf] %v960
        %1025 = vst [vmem:[%s230 + $0x7c] sm:$0xf] %v961
        %s1026 = sand.u32 %s119, 1
        %s1027 = scalar_lea.sflag [#allocation4], %s1026
        %s1028 = sand.u32 %s119, 1
        %s1029 = smul.addr %s1028, 128
        %s1030 = scalar_lea.vmem [#allocation7], %s1029
        // Predicated region
        $region45: #{tpu_custom_call.1} parent=35 // pred_check
          %p1031 = pneg %p129
        $region46: #{tpu_custom_call.1} parent=35 // pred_check_branch
          %1033 = sbr.rel (%p1031) target = $region48
        $region47: #{tpu_custom_call.1} parent=35 // pred_region
          %s1035 = ssub.s32 2048, 2048
          %1036 = vsyncadd %s1027, %s1035
          %s1037 = smul.addr %s22, 32
          %s1038 = smul.addr %s1037, 64
          %s1039 = scalar_lea.hbm %s4, %s1038
          %s1040 = sshll.u32 %s1030, 4
          %s1041 = int_to_ptr.vmem [resolvable:$true] %s1040
          %1046 = dma.vmem_to_hbm [thread:$0]  %s1041, 2048, %s1039, %s1027, 64, 64, 4
        $region48: #{tpu_custom_call.1} parent=35 // pred_fallthru
          _
      $region36: #{tpu_custom_call.1} parent=5 // pred_fallthru
        _
      %p1047 = scmp.le.s32.totalorder 2, %s17
      // Predicated region
      $region49: #{tpu_custom_call.1} parent=5 // pred_check
        %p1048 = pneg %p1047
      $region50: #{tpu_custom_call.1} parent=5 // pred_check_branch
        %1050 = sbr.rel (%p1048) target = $region52
      $region51: #{tpu_custom_call.1} parent=5 // pred_region
        %s1051 = ssub.s32 %s17, 2
        // Predicated region
        $region53: #{tpu_custom_call.1} parent=51 // pred_check
          %p1052 = pneg %p135
        $region54: #{tpu_custom_call.1} parent=51 // pred_check_branch
          %1054 = sbr.rel (%p1052) target = $region56
        $region55: #{tpu_custom_call.1} parent=51 // pred_region
          %s1055 = sand.u32 %s120, 1
          %s1056 = scalar_lea.sflag [#allocation4], %s1055
          %s1057 = sand.u32 %s120, 1
          %s1058 = smul.addr %s1057, 128
          %s1059 = scalar_lea.vmem [#allocation7], %s1058
          %1060 = dma.done %s1056, 2048
        $region56: #{tpu_custom_call.1} parent=51 // pred_fallthru
          _
      $region52: #{tpu_custom_call.1} parent=5 // pred_fallthru
        _
    $region6: #{tpu_custom_call.1} parent=1 // loop_footer
      %s21 = sadd.s32 1, %s17
    $region7: #{tpu_custom_call.1} parent=1 // loop_footer_branch
      %16 = sbr.rel target = $region3
    $region8: #{tpu_custom_call.1} parent=1 // loop_exit
      _
    %1061 = vsyncpa [#allocation3], 1
    %s1062 = scalar_lea.sflag [#allocation3], 1
    %1063 = vsyncpa %s1062, 1
    %1064 = vsyncpa [#allocation6], 1
    %1065 = vsyncpa [#allocation4], 1
    %s1066 = scalar_lea.sflag [#allocation4], 1
    %1067 = vsyncpa %s1066, 1

</llo_original>
